<compile_context>
chip_gen: v7x
topology: tpu7x:2x2x1
jax: 0.10.0
libtpu: 0.0.40
codegen_flags: <defaults>
</compile_context>

<pallas_src>
import functools
import math

import jax
import jax.numpy as jnp
from jax import lax
from jax.experimental import pallas as pl
from jax.experimental.pallas import tpu as pltpu


# ---------------------------------------------------------------------------
# shared in-kernel helpers (pure jnp, also used by the pure-JAX reference)
# ---------------------------------------------------------------------------
def _layer_norm(x, gamma, beta, eps=1e-6):
    # NOTE: eps=1e-6 (annotated-transformer convention); torch.nn.LayerNorm default is 1e-5.
    mu = jnp.mean(x, axis=-1, keepdims=True)
    var = jnp.mean(jnp.square(x - mu), axis=-1, keepdims=True)
    return (x - mu) * lax.rsqrt(var + eps) * gamma + beta


# ---------------------------------------------------------------------------
# Kernel 1: embedding row-gather * sqrt(n_units) + positional encoding
#   ids are scalar-prefetched to SMEM; table stays in HBM; rows are DMA-gathered.
# ---------------------------------------------------------------------------
def _embed_kernel(ids_ref, table_ref, pe_ref, out_ref, buf_ref, sem, *, scale, seq):
    b = pl.program_id(0)
    # Issue all row DMAs for this batch element, then wait for all of them.
    # TODO(synk): batch several rows per DMA descriptor for large seq (512 B/row is small).
    copies = []
    for t in range(seq):
        cp = pltpu.make_async_copy(table_ref.at[ids_ref[b * seq + t]], buf_ref.at[t], sem)
        cp.start()
        copies.append(cp)
    for cp in copies:
        cp.wait()
    out_ref[...] = buf_ref[...] * scale + pe_ref[...]


def embed(ids, table, pos_enc):
    batch, seq = ids.shape
    vocab, n_units = table.shape
    kern = functools.partial(_embed_kernel, scale=math.sqrt(float(n_units)), seq=seq)
    return pl.pallas_call(
        kern,
        out_shape=jax.ShapeDtypeStruct((batch * seq, n_units), jnp.float32),
        grid_spec=pltpu.PrefetchScalarGridSpec(
            num_scalar_prefetch=1,
            grid=(batch,),
            in_specs=[
                pl.BlockSpec(memory_space=pl.ANY),                    # table stays in HBM
                pl.BlockSpec((seq, n_units), lambda b, ids: (0, 0)),  # positional encoding (resident)
            ],
            out_specs=pl.BlockSpec((seq, n_units), lambda b, ids: (b, 0)),
            scratch_shapes=[
                pltpu.VMEM((seq, n_units), jnp.float32),
                pltpu.SemaphoreType.DMA(()),
            ],
        ),
        compiler_params=pltpu.CompilerParams(dimension_semantics=("parallel",)),
    )(ids.reshape(batch * seq).astype(jnp.int32), table, pos_enc)


# ---------------------------------------------------------------------------
# Kernel 2: fused transformer stack — one pallas_call, grid over layers.
#   Activation (batch*seq, n_units) is carried across layers in VMEM scratch;
#   per-layer weights are streamed (double-buffered) via the layer index_map.
# ---------------------------------------------------------------------------
def _stack_kernel(x_ref, mask_ref,
                  ln1g_ref, ln1b_ref, wqkv_ref, bqkv_ref, wo_ref, bo_ref,
                  ln2g_ref, ln2b_ref, w1_ref, b1_ref, w2_ref, b2_ref,
                  out_ref, act_ref, *, n_heads, d_k, batch, seq):
    l = pl.program_id(0)

    @pl.when(l == 0)
    def _():
        act_ref[...] = x_ref[...]

    x = act_ref[...]                      # (BT, D) activation carried across layers
    mask = mask_ref[...]                  # (B, S, S); >0 = attend, 0 = masked
    hd = n_heads * d_k

    # --- sublayer 1: x + MHA(LN(x), mask) -----------------------------------
    xn = _layer_norm(x, ln1g_ref[0], ln1b_ref[0])
    # One full-width fused QKV projection: (BT, D) @ (D, 3*H*dk).
    qkv = jnp.dot(xn, wqkv_ref[0], preferred_element_type=jnp.float32) + bqkv_ref[0]
    q = qkv[:, 0 * hd:1 * hd] * (1.0 / math.sqrt(float(d_k)))   # scale folded into q once
    k = qkv[:, 1 * hd:2 * hd]
    v = qkv[:, 2 * hd:3 * hd]

    def to_heads(a):  # (BT, H*dk) -> (H*B, S, dk); head h, batch b at index h*B + b
        return jnp.concatenate(
            [a[:, h * d_k:(h + 1) * d_k].reshape(batch, seq, d_k) for h in range(n_heads)],
            axis=0)

    qh, kh, vh = to_heads(q), to_heads(k), to_heads(v)
    # Batched over (head*batch): one score matmul and one P@V matmul.
    s = jnp.einsum('bqd,bkd->bqk', qh, kh, preferred_element_type=jnp.float32)  # (H*B, S, S)
    mask_hb = jnp.concatenate([mask] * n_heads, axis=0)                          # (H*B, S, S)
    s = jnp.where(mask_hb > 0, s, jnp.float32(-1e9))
    s = s - jnp.max(s, axis=-1, keepdims=True)
    p = jnp.exp(s)
    p = p * pl.reciprocal(jnp.sum(p, axis=-1, keepdims=True), approx=True)
    oh = jnp.einsum('bqk,bkd->bqd', p, vh, preferred_element_type=jnp.float32)   # (H*B, S, dk)

    # Concatenate heads back to (BT, H*dk) and do ONE output-projection matmul.
    attn = jnp.concatenate(
        [oh[h * batch:(h + 1) * batch].reshape(batch * seq, d_k) for h in range(n_heads)],
        axis=1)
    x1 = x + jnp.dot(attn, wo_ref[0], preferred_element_type=jnp.float32) + bo_ref[0]

    # --- sublayer 2: x1 + FFN(LN(x1)) ----------------------------------------
    x1n = _layer_norm(x1, ln2g_ref[0], ln2b_ref[0])
    h1 = jnp.maximum(
        jnp.dot(x1n, w1_ref[0], preferred_element_type=jnp.float32) + b1_ref[0],
        jnp.float32(0.0))
    y = x1 + jnp.dot(h1, w2_ref[0], preferred_element_type=jnp.float32) + b2_ref[0]

    act_ref[...] = y
    out_ref[...] = y


def transformer_stack(x2, mask_f, w, *, n_heads, d_k, batch, seq):
    n_layers = w["wqkv"].shape[0]
    bt, n_units = x2.shape
    d_ff = w["w1"].shape[2]
    qkv_w = 3 * n_heads * d_k

    def wspec(*dims):
        nd = len(dims)
        return pl.BlockSpec((1,) + dims, lambda l, _nd=nd: (l,) + (0,) * _nd)

    kern = functools.partial(_stack_kernel, n_heads=n_heads, d_k=d_k, batch=batch, seq=seq)
    return pl.pallas_call(
        kern,
        out_shape=jax.ShapeDtypeStruct((bt, n_units), jnp.float32),
        grid=(n_layers,),
        in_specs=[
            pl.BlockSpec((bt, n_units), lambda l: (0, 0)),          # layer-0 input (resident)
            pl.BlockSpec((batch, seq, seq), lambda l: (0, 0, 0)),   # mask (resident)
            wspec(1, n_units), wspec(1, n_units),                   # ln1 gamma/beta
            wspec(n_units, qkv_w), wspec(1, qkv_w),                 # fused Wqkv, bqkv
            wspec(n_heads * d_k, n_units), wspec(1, n_units),       # fused Wo, bo
            wspec(1, n_units), wspec(1, n_units),                   # ln2 gamma/beta
            wspec(n_units, d_ff), wspec(1, d_ff),                   # W1, b1
            wspec(d_ff, n_units), wspec(1, n_units),                # W2, b2
        ],
        out_specs=pl.BlockSpec((bt, n_units), lambda l: (0, 0)),
        scratch_shapes=[pltpu.VMEM((bt, n_units), jnp.float32)],
        compiler_params=pltpu.CompilerParams(
            dimension_semantics=("arbitrary",),
            vmem_limit_bytes=32 * 1024 * 1024),
    )(x2, mask_f,
      w["ln1_g"], w["ln1_b"], w["wqkv"], w["bqkv"], w["wo"], w["bo"],
      w["ln2_g"], w["ln2_b"], w["w1"], w["b1"], w["w2"], w["b2"])


# ---------------------------------------------------------------------------
# Kernel 3: final stack LayerNorm + output Linear + log_softmax (batch folded)
# ---------------------------------------------------------------------------
def _head_kernel(x_ref, g_ref, b_ref, w_ref, bias_ref, out_ref):
    xn = _layer_norm(x_ref[...], g_ref[...], b_ref[...])
    logits = jnp.dot(xn, w_ref[...], preferred_element_type=jnp.float32) + bias_ref[...]
    z = logits - jnp.max(logits, axis=-1, keepdims=True)
    out_ref[...] = z - jnp.log(jnp.sum(jnp.exp(z), axis=-1, keepdims=True))


def output_head(x2, lnf_g, lnf_b, w_out, b_out):
    bt, n_units = x2.shape
    vocab = w_out.shape[1]
    return pl.pallas_call(
        _head_kernel,
        out_shape=jax.ShapeDtypeStruct((bt, vocab), jnp.float32),
        grid=(1,),
        in_specs=[
            pl.BlockSpec((bt, n_units), lambda i: (0, 0)),
            pl.BlockSpec((1, n_units), lambda i: (0, 0)),
            pl.BlockSpec((1, n_units), lambda i: (0, 0)),
            pl.BlockSpec((n_units, vocab), lambda i: (0, 0)),
            pl.BlockSpec((1, vocab), lambda i: (0, 0)),
        ],
        out_specs=pl.BlockSpec((bt, vocab), lambda i: (0, 0)),
        compiler_params=pltpu.CompilerParams(dimension_semantics=("arbitrary",)),
    )(x2, lnf_g, lnf_b, w_out, b_out)


# ---------------------------------------------------------------------------
# Wrapper-side parameter fusion: per-head weights -> fused Wqkv / Wo, stacked over layers
# ---------------------------------------------------------------------------
def _stack_block_params(blocks, n_heads, d_k):
    def per_layer(blk):
        n_units = blk["wq"].shape[1]
        hd = n_heads * d_k

        def cat_w(w):   # (H, D, dk) -> (D, H*dk)
            return jnp.transpose(w, (1, 0, 2)).reshape(n_units, hd)

        def cat_b(b):   # (H, 1, dk) -> (1, H*dk)
            return jnp.transpose(b, (1, 0, 2)).reshape(1, hd)

        wqkv = jnp.concatenate([cat_w(blk["wq"]), cat_w(blk["wk"]), cat_w(blk["wv"])], axis=1)
        bqkv = jnp.concatenate([cat_b(blk["bq"]), cat_b(blk["bk"]), cat_b(blk["bv"])], axis=1)
        wo = blk["wo"].reshape(hd, n_units)      # concat of per-head (dk, D) along rows
        return dict(ln1_g=blk["ln1_g"], ln1_b=blk["ln1_b"], wqkv=wqkv, bqkv=bqkv,
                    wo=wo, bo=blk["bo"], ln2_g=blk["ln2_g"], ln2_b=blk["ln2_b"],
                    w1=blk["w1"], b1=blk["b1"], w2=blk["w2"], b2=blk["b2"])

    fused = [per_layer(b) for b in blocks]
    return {k: jnp.stack([f[k] for f in fused], axis=0) for k in fused[0]}


# ---------------------------------------------------------------------------
# Full forward pass (FullTransformer.forward)
# ---------------------------------------------------------------------------
def full_transformer(params, input_sequence, mask, *, n_heads, d_k):
    batch, seq = input_sequence.shape
    vocab, n_units = params["embed_table"].shape

    # embedding(input_sequence): table gather * sqrt(n_units) + positional encoding
    x = embed(input_sequence, params["embed_table"], params["pos_enc"])     # (B*S, D)

    # transformer_stack(embeddings, mask): fused pre-LN blocks, one kernel for all layers
    stacked = _stack_block_params(params["blocks"], n_heads, d_k)
    x = transformer_stack(x, mask.astype(jnp.float32), stacked,
                          n_heads=n_heads, d_k=d_k, batch=batch, seq=seq)   # (B*S, D)

    # log_softmax(output_layer(.)) with the stack's final LayerNorm fused in
    out = output_head(x, params["lnf_g"], params["lnf_b"],
                      params["w_out"], params["b_out"])                     # (B*S, V)
    return out.reshape(batch, seq, vocab)


# ---------------------------------------------------------------------------
# Pure-JAX reference for correctness checking
# ---------------------------------------------------------------------------
_HI = jax.lax.Precision.HIGHEST


def ref_forward(params, ids, mask, *, n_heads, d_k):
    table = params["embed_table"]
    _, d = table.shape
    x = table[ids] * math.sqrt(float(d)) + params["pos_enc"][None]
    m = mask.astype(jnp.float32)
    for blk in params["blocks"]:
        xn = _layer_norm(x, blk["ln1_g"], blk["ln1_b"])
        attn = jnp.zeros_like(x)
        for h in range(n_heads):
            q = jnp.matmul(xn, blk["wq"][h], precision=_HI) + blk["bq"][h]
            k = jnp.matmul(xn, blk["wk"][h], precision=_HI) + blk["bk"][h]
            v = jnp.matmul(xn, blk["wv"][h], precision=_HI) + blk["bv"][h]
            s = jnp.einsum("bqd,bkd->bqk", q, k, precision=_HI) / math.sqrt(float(d_k))
            s = jnp.where(m > 0, s, -1e9)
            p = jax.nn.softmax(s, axis=-1)
            o = jnp.einsum("bqk,bkd->bqd", p, v, precision=_HI)
            attn = attn + jnp.matmul(o, blk["wo"][h], precision=_HI)
        x = x + attn + blk["bo"]
        xn2 = _layer_norm(x, blk["ln2_g"], blk["ln2_b"])
        hdn = jax.nn.relu(jnp.matmul(xn2, blk["w1"], precision=_HI) + blk["b1"])
        x = x + jnp.matmul(hdn, blk["w2"], precision=_HI) + blk["b2"]
    xn = _layer_norm(x, params["lnf_g"], params["lnf_b"])
    logits = jnp.matmul(xn, params["w_out"], precision=_HI) + params["b_out"]
    return jax.nn.log_softmax(logits, axis=-1)


def sinusoidal_pos_encoding(seq, d):
    pos = jnp.arange(seq, dtype=jnp.float32)[:, None]
    div = jnp.exp(jnp.arange(0, d, 2, dtype=jnp.float32) * (-math.log(10000.0) / d))
    ang = pos * div[None, :]
    pe = jnp.zeros((seq, d), jnp.float32)
    pe = pe.at[:, 0::2].set(jnp.sin(ang))
    pe = pe.at[:, 1::2].set(jnp.cos(ang))
    return pe


if __name__ == "__main__":
    VOCAB, N_UNITS, N_HEADS, D_FF, N_BLOCKS = 128, 128, 4, 256, 2
    D_K = N_UNITS // N_HEADS
    BATCH, SEQ = 2, 16

    keys = iter(jax.random.split(jax.random.PRNGKey(0), 64))

    def nrm(shape, scale):
        return jax.random.normal(next(keys), shape, dtype=jnp.float32) * scale

    params = {
        "embed_table": nrm((VOCAB, N_UNITS), 1.0),
        "pos_enc": sinusoidal_pos_encoding(SEQ, N_UNITS),
        "blocks": [],
        "lnf_g": jnp.ones((1, N_UNITS), jnp.float32),
        "lnf_b": jnp.zeros((1, N_UNITS), jnp.float32),
        "w_out": nrm((N_UNITS, VOCAB), 0.05),
        "b_out": jnp.zeros((1, VOCAB), jnp.float32),
    }
    for _ in range(N_BLOCKS):
        params["blocks"].append({
            "ln1_g": jnp.ones((1, N_UNITS), jnp.float32),
            "ln1_b": jnp.zeros((1, N_UNITS), jnp.float32),
            "wq": nrm((N_HEADS, N_UNITS, D_K), 0.05),
            "bq": jnp.zeros((N_HEADS, 1, D_K), jnp.float32),
            "wk": nrm((N_HEADS, N_UNITS, D_K), 0.05),
            "bk": jnp.zeros((N_HEADS, 1, D_K), jnp.float32),
            "wv": nrm((N_HEADS, N_UNITS, D_K), 0.05),
            "bv": jnp.zeros((N_HEADS, 1, D_K), jnp.float32),
            "wo": nrm((N_HEADS, D_K, N_UNITS), 0.05),
            "bo": jnp.zeros((1, N_UNITS), jnp.float32),
            "ln2_g": jnp.ones((1, N_UNITS), jnp.float32),
            "ln2_b": jnp.zeros((1, N_UNITS), jnp.float32),
            "w1": nrm((N_UNITS, D_FF), 0.05),
            "b1": jnp.zeros((1, D_FF), jnp.float32),
            "w2": nrm((D_FF, N_UNITS), 0.05),
            "b2": jnp.zeros((1, N_UNITS), jnp.float32),
        })

    ids = jax.random.randint(next(keys), (BATCH, SEQ), 0, VOCAB, dtype=jnp.int32)
    causal = jnp.tril(jnp.ones((SEQ, SEQ), jnp.float32))
    mask = jnp.tile(causal[None], (BATCH, 1, 1))

    out = full_transformer(params, ids, mask, n_heads=N_HEADS, d_k=D_K)
    out = jax.block_until_ready(out)
    assert out.shape == (BATCH, SEQ, VOCAB)

    ref = ref_forward(params, ids, mask, n_heads=N_HEADS, d_k=D_K)
    max_err = float(jnp.max(jnp.abs(out - ref)))
    assert jnp.allclose(out, ref, atol=1e-2, rtol=1e-2), f"max |err| = {max_err}"
    # log-probs should exponentiate to a normalized distribution
    assert jnp.allclose(jnp.exp(out).sum(-1), 1.0, atol=2e-3)

    print("KERNEL_OK")
</pallas_src>

<mosaic_0001>
module attributes {stable_mosaic.version = 11 : i64} {
  func.func @_embed_kernel(%arg0: i32, %arg1: memref<32xi32, #tpu.memory_space<smem>>, %arg2: memref<128x128xf32, #tpu.memory_space<any>>, %arg3: memref<16x128xf32, #tpu.memory_space<vmem>>, %arg4: memref<16x128xf32, #tpu.memory_space<vmem>>, %arg5: memref<16x128xf32, #tpu.memory_space<vmem>>, %arg6: memref<!tpu.dma_semaphore, #tpu.memory_space<semaphore_mem>>) attributes {dimension_semantics = [#tpu.dimension_semantics<parallel>], iteration_bounds = array<i64: 2>, scalar_prefetch = 1 : i64, scratch_operands = 2 : i64, tpu.core_type = #tpu.core_type<tc>, window_params = [{}, {pipeline_mode = #tpu.pipeline_mode<synchronous>, transform_indices = @transform_1, window_bounds = array<i64: 16, 128>}, {transform_indices = @transform_2, window_bounds = array<i64: 16, 128>}]} {
    %c16_i32 = arith.constant 16 : i32
    %0 = arith.muli %arg0, %c16_i32 : i32
    %c0_i32 = arith.constant 0 : i32
    %1 = arith.addi %0, %c0_i32 : i32
    %2 = arith.index_cast %1 : i32 to index
    %3 = memref.load %arg1[%2] : memref<32xi32, #tpu.memory_space<smem>>
    %c0_i32_0 = arith.constant 0 : i32
    %c0_i32_1 = arith.constant 0 : i32
    %4 = tpu.memref_slice %arg2[%3, %c0_i32_1] : memref<128x128xf32, #tpu.memory_space<any>> -> memref<1x128xf32, #tpu.memory_space<any>>
    %5 = tpu.memref_squeeze %4 : memref<1x128xf32, #tpu.memory_space<any>> -> memref<128xf32, #tpu.memory_space<any>>
    %c0_i32_2 = arith.constant 0 : i32
    %6 = tpu.memref_slice %arg5[%c0_i32_0, %c0_i32_2] : memref<16x128xf32, #tpu.memory_space<vmem>> -> memref<1x128xf32, #tpu.memory_space<vmem>>
    %7 = tpu.memref_squeeze %6 : memref<1x128xf32, #tpu.memory_space<vmem>> -> memref<128xf32, #tpu.memory_space<vmem>>
    tpu.enqueue_dma source(%5 : memref<128xf32, #tpu.memory_space<any>>) target(%7 : memref<128xf32, #tpu.memory_space<vmem>>) target_semaphore(%arg6 : memref<!tpu.dma_semaphore, #tpu.memory_space<semaphore_mem>>)
    %c16_i32_3 = arith.constant 16 : i32
    %8 = arith.muli %arg0, %c16_i32_3 : i32
    %c1_i32 = arith.constant 1 : i32
    %9 = arith.addi %8, %c1_i32 : i32
    %10 = arith.index_cast %9 : i32 to index
    %11 = memref.load %arg1[%10] : memref<32xi32, #tpu.memory_space<smem>>
    %c1_i32_4 = arith.constant 1 : i32
    %c0_i32_5 = arith.constant 0 : i32
    %12 = tpu.memref_slice %arg2[%11, %c0_i32_5] : memref<128x128xf32, #tpu.memory_space<any>> -> memref<1x128xf32, #tpu.memory_space<any>>
    %13 = tpu.memref_squeeze %12 : memref<1x128xf32, #tpu.memory_space<any>> -> memref<128xf32, #tpu.memory_space<any>>
    %c0_i32_6 = arith.constant 0 : i32
    %14 = tpu.memref_slice %arg5[%c1_i32_4, %c0_i32_6] : memref<16x128xf32, #tpu.memory_space<vmem>> -> memref<1x128xf32, #tpu.memory_space<vmem>>
    %15 = tpu.memref_squeeze %14 : memref<1x128xf32, #tpu.memory_space<vmem>> -> memref<128xf32, #tpu.memory_space<vmem>>
    tpu.enqueue_dma source(%13 : memref<128xf32, #tpu.memory_space<any>>) target(%15 : memref<128xf32, #tpu.memory_space<vmem>>) target_semaphore(%arg6 : memref<!tpu.dma_semaphore, #tpu.memory_space<semaphore_mem>>)
    %c16_i32_7 = arith.constant 16 : i32
    %16 = arith.muli %arg0, %c16_i32_7 : i32
    %c2_i32 = arith.constant 2 : i32
    %17 = arith.addi %16, %c2_i32 : i32
    %18 = arith.index_cast %17 : i32 to index
    %19 = memref.load %arg1[%18] : memref<32xi32, #tpu.memory_space<smem>>
    %c2_i32_8 = arith.constant 2 : i32
    %c0_i32_9 = arith.constant 0 : i32
    %20 = tpu.memref_slice %arg2[%19, %c0_i32_9] : memref<128x128xf32, #tpu.memory_space<any>> -> memref<1x128xf32, #tpu.memory_space<any>>
    %21 = tpu.memref_squeeze %20 : memref<1x128xf32, #tpu.memory_space<any>> -> memref<128xf32, #tpu.memory_space<any>>
    %c0_i32_10 = arith.constant 0 : i32
    %22 = tpu.memref_slice %arg5[%c2_i32_8, %c0_i32_10] : memref<16x128xf32, #tpu.memory_space<vmem>> -> memref<1x128xf32, #tpu.memory_space<vmem>>
    %23 = tpu.memref_squeeze %22 : memref<1x128xf32, #tpu.memory_space<vmem>> -> memref<128xf32, #tpu.memory_space<vmem>>
    tpu.enqueue_dma source(%21 : memref<128xf32, #tpu.memory_space<any>>) target(%23 : memref<128xf32, #tpu.memory_space<vmem>>) target_semaphore(%arg6 : memref<!tpu.dma_semaphore, #tpu.memory_space<semaphore_mem>>)
    %c16_i32_11 = arith.constant 16 : i32
    %24 = arith.muli %arg0, %c16_i32_11 : i32
    %c3_i32 = arith.constant 3 : i32
    %25 = arith.addi %24, %c3_i32 : i32
    %26 = arith.index_cast %25 : i32 to index
    %27 = memref.load %arg1[%26] : memref<32xi32, #tpu.memory_space<smem>>
    %c3_i32_12 = arith.constant 3 : i32
    %c0_i32_13 = arith.constant 0 : i32
    %28 = tpu.memref_slice %arg2[%27, %c0_i32_13] : memref<128x128xf32, #tpu.memory_space<any>> -> memref<1x128xf32, #tpu.memory_space<any>>
    %29 = tpu.memref_squeeze %28 : memref<1x128xf32, #tpu.memory_space<any>> -> memref<128xf32, #tpu.memory_space<any>>
    %c0_i32_14 = arith.constant 0 : i32
    %30 = tpu.memref_slice %arg5[%c3_i32_12, %c0_i32_14] : memref<16x128xf32, #tpu.memory_space<vmem>> -> memref<1x128xf32, #tpu.memory_space<vmem>>
    %31 = tpu.memref_squeeze %30 : memref<1x128xf32, #tpu.memory_space<vmem>> -> memref<128xf32, #tpu.memory_space<vmem>>
    tpu.enqueue_dma source(%29 : memref<128xf32, #tpu.memory_space<any>>) target(%31 : memref<128xf32, #tpu.memory_space<vmem>>) target_semaphore(%arg6 : memref<!tpu.dma_semaphore, #tpu.memory_space<semaphore_mem>>)
    %c16_i32_15 = arith.constant 16 : i32
    %32 = arith.muli %arg0, %c16_i32_15 : i32
    %c4_i32 = arith.constant 4 : i32
    %33 = arith.addi %32, %c4_i32 : i32
    %34 = arith.index_cast %33 : i32 to index
    %35 = memref.load %arg1[%34] : memref<32xi32, #tpu.memory_space<smem>>
    %c4_i32_16 = arith.constant 4 : i32
    %c0_i32_17 = arith.constant 0 : i32
    %36 = tpu.memref_slice %arg2[%35, %c0_i32_17] : memref<128x128xf32, #tpu.memory_space<any>> -> memref<1x128xf32, #tpu.memory_space<any>>
    %37 = tpu.memref_squeeze %36 : memref<1x128xf32, #tpu.memory_space<any>> -> memref<128xf32, #tpu.memory_space<any>>
    %c0_i32_18 = arith.constant 0 : i32
    %38 = tpu.memref_slice %arg5[%c4_i32_16, %c0_i32_18] : memref<16x128xf32, #tpu.memory_space<vmem>> -> memref<1x128xf32, #tpu.memory_space<vmem>>
    %39 = tpu.memref_squeeze %38 : memref<1x128xf32, #tpu.memory_space<vmem>> -> memref<128xf32, #tpu.memory_space<vmem>>
    tpu.enqueue_dma source(%37 : memref<128xf32, #tpu.memory_space<any>>) target(%39 : memref<128xf32, #tpu.memory_space<vmem>>) target_semaphore(%arg6 : memref<!tpu.dma_semaphore, #tpu.memory_space<semaphore_mem>>)
    %c16_i32_19 = arith.constant 16 : i32
    %40 = arith.muli %arg0, %c16_i32_19 : i32
    %c5_i32 = arith.constant 5 : i32
    %41 = arith.addi %40, %c5_i32 : i32
    %42 = arith.index_cast %41 : i32 to index
    %43 = memref.load %arg1[%42] : memref<32xi32, #tpu.memory_space<smem>>
    %c5_i32_20 = arith.constant 5 : i32
    %c0_i32_21 = arith.constant 0 : i32
    %44 = tpu.memref_slice %arg2[%43, %c0_i32_21] : memref<128x128xf32, #tpu.memory_space<any>> -> memref<1x128xf32, #tpu.memory_space<any>>
    %45 = tpu.memref_squeeze %44 : memref<1x128xf32, #tpu.memory_space<any>> -> memref<128xf32, #tpu.memory_space<any>>
    %c0_i32_22 = arith.constant 0 : i32
    %46 = tpu.memref_slice %arg5[%c5_i32_20, %c0_i32_22] : memref<16x128xf32, #tpu.memory_space<vmem>> -> memref<1x128xf32, #tpu.memory_space<vmem>>
    %47 = tpu.memref_squeeze %46 : memref<1x128xf32, #tpu.memory_space<vmem>> -> memref<128xf32, #tpu.memory_space<vmem>>
    tpu.enqueue_dma source(%45 : memref<128xf32, #tpu.memory_space<any>>) target(%47 : memref<128xf32, #tpu.memory_space<vmem>>) target_semaphore(%arg6 : memref<!tpu.dma_semaphore, #tpu.memory_space<semaphore_mem>>)
    %c16_i32_23 = arith.constant 16 : i32
    %48 = arith.muli %arg0, %c16_i32_23 : i32
    %c6_i32 = arith.constant 6 : i32
    %49 = arith.addi %48, %c6_i32 : i32
    %50 = arith.index_cast %49 : i32 to index
    %51 = memref.load %arg1[%50] : memref<32xi32, #tpu.memory_space<smem>>
    %c6_i32_24 = arith.constant 6 : i32
    %c0_i32_25 = arith.constant 0 : i32
    %52 = tpu.memref_slice %arg2[%51, %c0_i32_25] : memref<128x128xf32, #tpu.memory_space<any>> -> memref<1x128xf32, #tpu.memory_space<any>>
    %53 = tpu.memref_squeeze %52 : memref<1x128xf32, #tpu.memory_space<any>> -> memref<128xf32, #tpu.memory_space<any>>
    %c0_i32_26 = arith.constant 0 : i32
    %54 = tpu.memref_slice %arg5[%c6_i32_24, %c0_i32_26] : memref<16x128xf32, #tpu.memory_space<vmem>> -> memref<1x128xf32, #tpu.memory_space<vmem>>
    %55 = tpu.memref_squeeze %54 : memref<1x128xf32, #tpu.memory_space<vmem>> -> memref<128xf32, #tpu.memory_space<vmem>>
    tpu.enqueue_dma source(%53 : memref<128xf32, #tpu.memory_space<any>>) target(%55 : memref<128xf32, #tpu.memory_space<vmem>>) target_semaphore(%arg6 : memref<!tpu.dma_semaphore, #tpu.memory_space<semaphore_mem>>)
    %c16_i32_27 = arith.constant 16 : i32
    %56 = arith.muli %arg0, %c16_i32_27 : i32
    %c7_i32 = arith.constant 7 : i32
    %57 = arith.addi %56, %c7_i32 : i32
    %58 = arith.index_cast %57 : i32 to index
    %59 = memref.load %arg1[%58] : memref<32xi32, #tpu.memory_space<smem>>
    %c7_i32_28 = arith.constant 7 : i32
    %c0_i32_29 = arith.constant 0 : i32
    %60 = tpu.memref_slice %arg2[%59, %c0_i32_29] : memref<128x128xf32, #tpu.memory_space<any>> -> memref<1x128xf32, #tpu.memory_space<any>>
    %61 = tpu.memref_squeeze %60 : memref<1x128xf32, #tpu.memory_space<any>> -> memref<128xf32, #tpu.memory_space<any>>
    %c0_i32_30 = arith.constant 0 : i32
    %62 = tpu.memref_slice %arg5[%c7_i32_28, %c0_i32_30] : memref<16x128xf32, #tpu.memory_space<vmem>> -> memref<1x128xf32, #tpu.memory_space<vmem>>
    %63 = tpu.memref_squeeze %62 : memref<1x128xf32, #tpu.memory_space<vmem>> -> memref<128xf32, #tpu.memory_space<vmem>>
    tpu.enqueue_dma source(%61 : memref<128xf32, #tpu.memory_space<any>>) target(%63 : memref<128xf32, #tpu.memory_space<vmem>>) target_semaphore(%arg6 : memref<!tpu.dma_semaphore, #tpu.memory_space<semaphore_mem>>)
    %c16_i32_31 = arith.constant 16 : i32
    %64 = arith.muli %arg0, %c16_i32_31 : i32
    %c8_i32 = arith.constant 8 : i32
    %65 = arith.addi %64, %c8_i32 : i32
    %66 = arith.index_cast %65 : i32 to index
    %67 = memref.load %arg1[%66] : memref<32xi32, #tpu.memory_space<smem>>
    %c8_i32_32 = arith.constant 8 : i32
    %c0_i32_33 = arith.constant 0 : i32
    %68 = tpu.memref_slice %arg2[%67, %c0_i32_33] : memref<128x128xf32, #tpu.memory_space<any>> -> memref<1x128xf32, #tpu.memory_space<any>>
    %69 = tpu.memref_squeeze %68 : memref<1x128xf32, #tpu.memory_space<any>> -> memref<128xf32, #tpu.memory_space<any>>
    %c0_i32_34 = arith.constant 0 : i32
    %70 = tpu.memref_slice %arg5[%c8_i32_32, %c0_i32_34] : memref<16x128xf32, #tpu.memory_space<vmem>> -> memref<1x128xf32, #tpu.memory_space<vmem>>
    %71 = tpu.memref_squeeze %70 : memref<1x128xf32, #tpu.memory_space<vmem>> -> memref<128xf32, #tpu.memory_space<vmem>>
    tpu.enqueue_dma source(%69 : memref<128xf32, #tpu.memory_space<any>>) target(%71 : memref<128xf32, #tpu.memory_space<vmem>>) target_semaphore(%arg6 : memref<!tpu.dma_semaphore, #tpu.memory_space<semaphore_mem>>)
    %c16_i32_35 = arith.constant 16 : i32
    %72 = arith.muli %arg0, %c16_i32_35 : i32
    %c9_i32 = arith.constant 9 : i32
    %73 = arith.addi %72, %c9_i32 : i32
    %74 = arith.index_cast %73 : i32 to index
    %75 = memref.load %arg1[%74] : memref<32xi32, #tpu.memory_space<smem>>
    %c9_i32_36 = arith.constant 9 : i32
    %c0_i32_37 = arith.constant 0 : i32
    %76 = tpu.memref_slice %arg2[%75, %c0_i32_37] : memref<128x128xf32, #tpu.memory_space<any>> -> memref<1x128xf32, #tpu.memory_space<any>>
    %77 = tpu.memref_squeeze %76 : memref<1x128xf32, #tpu.memory_space<any>> -> memref<128xf32, #tpu.memory_space<any>>
    %c0_i32_38 = arith.constant 0 : i32
    %78 = tpu.memref_slice %arg5[%c9_i32_36, %c0_i32_38] : memref<16x128xf32, #tpu.memory_space<vmem>> -> memref<1x128xf32, #tpu.memory_space<vmem>>
    %79 = tpu.memref_squeeze %78 : memref<1x128xf32, #tpu.memory_space<vmem>> -> memref<128xf32, #tpu.memory_space<vmem>>
    tpu.enqueue_dma source(%77 : memref<128xf32, #tpu.memory_space<any>>) target(%79 : memref<128xf32, #tpu.memory_space<vmem>>) target_semaphore(%arg6 : memref<!tpu.dma_semaphore, #tpu.memory_space<semaphore_mem>>)
    %c16_i32_39 = arith.constant 16 : i32
    %80 = arith.muli %arg0, %c16_i32_39 : i32
    %c10_i32 = arith.constant 10 : i32
    %81 = arith.addi %80, %c10_i32 : i32
    %82 = arith.index_cast %81 : i32 to index
    %83 = memref.load %arg1[%82] : memref<32xi32, #tpu.memory_space<smem>>
    %c10_i32_40 = arith.constant 10 : i32
    %c0_i32_41 = arith.constant 0 : i32
    %84 = tpu.memref_slice %arg2[%83, %c0_i32_41] : memref<128x128xf32, #tpu.memory_space<any>> -> memref<1x128xf32, #tpu.memory_space<any>>
    %85 = tpu.memref_squeeze %84 : memref<1x128xf32, #tpu.memory_space<any>> -> memref<128xf32, #tpu.memory_space<any>>
    %c0_i32_42 = arith.constant 0 : i32
    %86 = tpu.memref_slice %arg5[%c10_i32_40, %c0_i32_42] : memref<16x128xf32, #tpu.memory_space<vmem>> -> memref<1x128xf32, #tpu.memory_space<vmem>>
    %87 = tpu.memref_squeeze %86 : memref<1x128xf32, #tpu.memory_space<vmem>> -> memref<128xf32, #tpu.memory_space<vmem>>
    tpu.enqueue_dma source(%85 : memref<128xf32, #tpu.memory_space<any>>) target(%87 : memref<128xf32, #tpu.memory_space<vmem>>) target_semaphore(%arg6 : memref<!tpu.dma_semaphore, #tpu.memory_space<semaphore_mem>>)
    %c16_i32_43 = arith.constant 16 : i32
    %88 = arith.muli %arg0, %c16_i32_43 : i32
    %c11_i32 = arith.constant 11 : i32
    %89 = arith.addi %88, %c11_i32 : i32
    %90 = arith.index_cast %89 : i32 to index
    %91 = memref.load %arg1[%90] : memref<32xi32, #tpu.memory_space<smem>>
    %c11_i32_44 = arith.constant 11 : i32
    %c0_i32_45 = arith.constant 0 : i32
    %92 = tpu.memref_slice %arg2[%91, %c0_i32_45] : memref<128x128xf32, #tpu.memory_space<any>> -> memref<1x128xf32, #tpu.memory_space<any>>
    %93 = tpu.memref_squeeze %92 : memref<1x128xf32, #tpu.memory_space<any>> -> memref<128xf32, #tpu.memory_space<any>>
    %c0_i32_46 = arith.constant 0 : i32
    %94 = tpu.memref_slice %arg5[%c11_i32_44, %c0_i32_46] : memref<16x128xf32, #tpu.memory_space<vmem>> -> memref<1x128xf32, #tpu.memory_space<vmem>>
    %95 = tpu.memref_squeeze %94 : memref<1x128xf32, #tpu.memory_space<vmem>> -> memref<128xf32, #tpu.memory_space<vmem>>
    tpu.enqueue_dma source(%93 : memref<128xf32, #tpu.memory_space<any>>) target(%95 : memref<128xf32, #tpu.memory_space<vmem>>) target_semaphore(%arg6 : memref<!tpu.dma_semaphore, #tpu.memory_space<semaphore_mem>>)
    %c16_i32_47 = arith.constant 16 : i32
    %96 = arith.muli %arg0, %c16_i32_47 : i32
    %c12_i32 = arith.constant 12 : i32
    %97 = arith.addi %96, %c12_i32 : i32
    %98 = arith.index_cast %97 : i32 to index
    %99 = memref.load %arg1[%98] : memref<32xi32, #tpu.memory_space<smem>>
    %c12_i32_48 = arith.constant 12 : i32
    %c0_i32_49 = arith.constant 0 : i32
    %100 = tpu.memref_slice %arg2[%99, %c0_i32_49] : memref<128x128xf32, #tpu.memory_space<any>> -> memref<1x128xf32, #tpu.memory_space<any>>
    %101 = tpu.memref_squeeze %100 : memref<1x128xf32, #tpu.memory_space<any>> -> memref<128xf32, #tpu.memory_space<any>>
    %c0_i32_50 = arith.constant 0 : i32
    %102 = tpu.memref_slice %arg5[%c12_i32_48, %c0_i32_50] : memref<16x128xf32, #tpu.memory_space<vmem>> -> memref<1x128xf32, #tpu.memory_space<vmem>>
    %103 = tpu.memref_squeeze %102 : memref<1x128xf32, #tpu.memory_space<vmem>> -> memref<128xf32, #tpu.memory_space<vmem>>
    tpu.enqueue_dma source(%101 : memref<128xf32, #tpu.memory_space<any>>) target(%103 : memref<128xf32, #tpu.memory_space<vmem>>) target_semaphore(%arg6 : memref<!tpu.dma_semaphore, #tpu.memory_space<semaphore_mem>>)
    %c16_i32_51 = arith.constant 16 : i32
    %104 = arith.muli %arg0, %c16_i32_51 : i32
    %c13_i32 = arith.constant 13 : i32
    %105 = arith.addi %104, %c13_i32 : i32
    %106 = arith.index_cast %105 : i32 to index
    %107 = memref.load %arg1[%106] : memref<32xi32, #tpu.memory_space<smem>>
    %c13_i32_52 = arith.constant 13 : i32
    %c0_i32_53 = arith.constant 0 : i32
    %108 = tpu.memref_slice %arg2[%107, %c0_i32_53] : memref<128x128xf32, #tpu.memory_space<any>> -> memref<1x128xf32, #tpu.memory_space<any>>
    %109 = tpu.memref_squeeze %108 : memref<1x128xf32, #tpu.memory_space<any>> -> memref<128xf32, #tpu.memory_space<any>>
    %c0_i32_54 = arith.constant 0 : i32
    %110 = tpu.memref_slice %arg5[%c13_i32_52, %c0_i32_54] : memref<16x128xf32, #tpu.memory_space<vmem>> -> memref<1x128xf32, #tpu.memory_space<vmem>>
    %111 = tpu.memref_squeeze %110 : memref<1x128xf32, #tpu.memory_space<vmem>> -> memref<128xf32, #tpu.memory_space<vmem>>
    tpu.enqueue_dma source(%109 : memref<128xf32, #tpu.memory_space<any>>) target(%111 : memref<128xf32, #tpu.memory_space<vmem>>) target_semaphore(%arg6 : memref<!tpu.dma_semaphore, #tpu.memory_space<semaphore_mem>>)
    %c16_i32_55 = arith.constant 16 : i32
    %112 = arith.muli %arg0, %c16_i32_55 : i32
    %c14_i32 = arith.constant 14 : i32
    %113 = arith.addi %112, %c14_i32 : i32
    %114 = arith.index_cast %113 : i32 to index
    %115 = memref.load %arg1[%114] : memref<32xi32, #tpu.memory_space<smem>>
    %c14_i32_56 = arith.constant 14 : i32
    %c0_i32_57 = arith.constant 0 : i32
    %116 = tpu.memref_slice %arg2[%115, %c0_i32_57] : memref<128x128xf32, #tpu.memory_space<any>> -> memref<1x128xf32, #tpu.memory_space<any>>
    %117 = tpu.memref_squeeze %116 : memref<1x128xf32, #tpu.memory_space<any>> -> memref<128xf32, #tpu.memory_space<any>>
    %c0_i32_58 = arith.constant 0 : i32
    %118 = tpu.memref_slice %arg5[%c14_i32_56, %c0_i32_58] : memref<16x128xf32, #tpu.memory_space<vmem>> -> memref<1x128xf32, #tpu.memory_space<vmem>>
    %119 = tpu.memref_squeeze %118 : memref<1x128xf32, #tpu.memory_space<vmem>> -> memref<128xf32, #tpu.memory_space<vmem>>
    tpu.enqueue_dma source(%117 : memref<128xf32, #tpu.memory_space<any>>) target(%119 : memref<128xf32, #tpu.memory_space<vmem>>) target_semaphore(%arg6 : memref<!tpu.dma_semaphore, #tpu.memory_space<semaphore_mem>>)
    %c16_i32_59 = arith.constant 16 : i32
    %120 = arith.muli %arg0, %c16_i32_59 : i32
    %c15_i32 = arith.constant 15 : i32
    %121 = arith.addi %120, %c15_i32 : i32
    %122 = arith.index_cast %121 : i32 to index
    %123 = memref.load %arg1[%122] : memref<32xi32, #tpu.memory_space<smem>>
    %c15_i32_60 = arith.constant 15 : i32
    %c0_i32_61 = arith.constant 0 : i32
    %124 = tpu.memref_slice %arg2[%123, %c0_i32_61] : memref<128x128xf32, #tpu.memory_space<any>> -> memref<1x128xf32, #tpu.memory_space<any>>
    %125 = tpu.memref_squeeze %124 : memref<1x128xf32, #tpu.memory_space<any>> -> memref<128xf32, #tpu.memory_space<any>>
    %c0_i32_62 = arith.constant 0 : i32
    %126 = tpu.memref_slice %arg5[%c15_i32_60, %c0_i32_62] : memref<16x128xf32, #tpu.memory_space<vmem>> -> memref<1x128xf32, #tpu.memory_space<vmem>>
    %127 = tpu.memref_squeeze %126 : memref<1x128xf32, #tpu.memory_space<vmem>> -> memref<128xf32, #tpu.memory_space<vmem>>
    tpu.enqueue_dma source(%125 : memref<128xf32, #tpu.memory_space<any>>) target(%127 : memref<128xf32, #tpu.memory_space<vmem>>) target_semaphore(%arg6 : memref<!tpu.dma_semaphore, #tpu.memory_space<semaphore_mem>>)
    %c0_i32_63 = arith.constant 0 : i32
    %c0_i32_64 = arith.constant 0 : i32
    %128 = tpu.memref_slice %arg2[%3, %c0_i32_64] : memref<128x128xf32, #tpu.memory_space<any>> -> memref<1x128xf32, #tpu.memory_space<any>>
    %129 = tpu.memref_squeeze %128 : memref<1x128xf32, #tpu.memory_space<any>> -> memref<128xf32, #tpu.memory_space<any>>
    %c0_i32_65 = arith.constant 0 : i32
    %130 = tpu.memref_slice %arg5[%c0_i32_63, %c0_i32_65] : memref<16x128xf32, #tpu.memory_space<vmem>> -> memref<1x128xf32, #tpu.memory_space<vmem>>
    %131 = tpu.memref_squeeze %130 : memref<1x128xf32, #tpu.memory_space<vmem>> -> memref<128xf32, #tpu.memory_space<vmem>>
    tpu.wait_dma2 semaphore(%arg6 : memref<!tpu.dma_semaphore, #tpu.memory_space<semaphore_mem>>) src(%129 : memref<128xf32, #tpu.memory_space<any>>) dst(%131 : memref<128xf32, #tpu.memory_space<vmem>>)
    %c1_i32_66 = arith.constant 1 : i32
    %c0_i32_67 = arith.constant 0 : i32
    %132 = tpu.memref_slice %arg2[%11, %c0_i32_67] : memref<128x128xf32, #tpu.memory_space<any>> -> memref<1x128xf32, #tpu.memory_space<any>>
    %133 = tpu.memref_squeeze %132 : memref<1x128xf32, #tpu.memory_space<any>> -> memref<128xf32, #tpu.memory_space<any>>
    %c0_i32_68 = arith.constant 0 : i32
    %134 = tpu.memref_slice %arg5[%c1_i32_66, %c0_i32_68] : memref<16x128xf32, #tpu.memory_space<vmem>> -> memref<1x128xf32, #tpu.memory_space<vmem>>
    %135 = tpu.memref_squeeze %134 : memref<1x128xf32, #tpu.memory_space<vmem>> -> memref<128xf32, #tpu.memory_space<vmem>>
    tpu.wait_dma2 semaphore(%arg6 : memref<!tpu.dma_semaphore, #tpu.memory_space<semaphore_mem>>) src(%133 : memref<128xf32, #tpu.memory_space<any>>) dst(%135 : memref<128xf32, #tpu.memory_space<vmem>>)
    %c2_i32_69 = arith.constant 2 : i32
    %c0_i32_70 = arith.constant 0 : i32
    %136 = tpu.memref_slice %arg2[%19, %c0_i32_70] : memref<128x128xf32, #tpu.memory_space<any>> -> memref<1x128xf32, #tpu.memory_space<any>>
    %137 = tpu.memref_squeeze %136 : memref<1x128xf32, #tpu.memory_space<any>> -> memref<128xf32, #tpu.memory_space<any>>
    %c0_i32_71 = arith.constant 0 : i32
    %138 = tpu.memref_slice %arg5[%c2_i32_69, %c0_i32_71] : memref<16x128xf32, #tpu.memory_space<vmem>> -> memref<1x128xf32, #tpu.memory_space<vmem>>
    %139 = tpu.memref_squeeze %138 : memref<1x128xf32, #tpu.memory_space<vmem>> -> memref<128xf32, #tpu.memory_space<vmem>>
    tpu.wait_dma2 semaphore(%arg6 : memref<!tpu.dma_semaphore, #tpu.memory_space<semaphore_mem>>) src(%137 : memref<128xf32, #tpu.memory_space<any>>) dst(%139 : memref<128xf32, #tpu.memory_space<vmem>>)
    %c3_i32_72 = arith.constant 3 : i32
    %c0_i32_73 = arith.constant 0 : i32
    %140 = tpu.memref_slice %arg2[%27, %c0_i32_73] : memref<128x128xf32, #tpu.memory_space<any>> -> memref<1x128xf32, #tpu.memory_space<any>>
    %141 = tpu.memref_squeeze %140 : memref<1x128xf32, #tpu.memory_space<any>> -> memref<128xf32, #tpu.memory_space<any>>
    %c0_i32_74 = arith.constant 0 : i32
    %142 = tpu.memref_slice %arg5[%c3_i32_72, %c0_i32_74] : memref<16x128xf32, #tpu.memory_space<vmem>> -> memref<1x128xf32, #tpu.memory_space<vmem>>
    %143 = tpu.memref_squeeze %142 : memref<1x128xf32, #tpu.memory_space<vmem>> -> memref<128xf32, #tpu.memory_space<vmem>>
    tpu.wait_dma2 semaphore(%arg6 : memref<!tpu.dma_semaphore, #tpu.memory_space<semaphore_mem>>) src(%141 : memref<128xf32, #tpu.memory_space<any>>) dst(%143 : memref<128xf32, #tpu.memory_space<vmem>>)
    %c4_i32_75 = arith.constant 4 : i32
    %c0_i32_76 = arith.constant 0 : i32
    %144 = tpu.memref_slice %arg2[%35, %c0_i32_76] : memref<128x128xf32, #tpu.memory_space<any>> -> memref<1x128xf32, #tpu.memory_space<any>>
    %145 = tpu.memref_squeeze %144 : memref<1x128xf32, #tpu.memory_space<any>> -> memref<128xf32, #tpu.memory_space<any>>
    %c0_i32_77 = arith.constant 0 : i32
    %146 = tpu.memref_slice %arg5[%c4_i32_75, %c0_i32_77] : memref<16x128xf32, #tpu.memory_space<vmem>> -> memref<1x128xf32, #tpu.memory_space<vmem>>
    %147 = tpu.memref_squeeze %146 : memref<1x128xf32, #tpu.memory_space<vmem>> -> memref<128xf32, #tpu.memory_space<vmem>>
    tpu.wait_dma2 semaphore(%arg6 : memref<!tpu.dma_semaphore, #tpu.memory_space<semaphore_mem>>) src(%145 : memref<128xf32, #tpu.memory_space<any>>) dst(%147 : memref<128xf32, #tpu.memory_space<vmem>>)
    %c5_i32_78 = arith.constant 5 : i32
    %c0_i32_79 = arith.constant 0 : i32
    %148 = tpu.memref_slice %arg2[%43, %c0_i32_79] : memref<128x128xf32, #tpu.memory_space<any>> -> memref<1x128xf32, #tpu.memory_space<any>>
    %149 = tpu.memref_squeeze %148 : memref<1x128xf32, #tpu.memory_space<any>> -> memref<128xf32, #tpu.memory_space<any>>
    %c0_i32_80 = arith.constant 0 : i32
    %150 = tpu.memref_slice %arg5[%c5_i32_78, %c0_i32_80] : memref<16x128xf32, #tpu.memory_space<vmem>> -> memref<1x128xf32, #tpu.memory_space<vmem>>
    %151 = tpu.memref_squeeze %150 : memref<1x128xf32, #tpu.memory_space<vmem>> -> memref<128xf32, #tpu.memory_space<vmem>>
    tpu.wait_dma2 semaphore(%arg6 : memref<!tpu.dma_semaphore, #tpu.memory_space<semaphore_mem>>) src(%149 : memref<128xf32, #tpu.memory_space<any>>) dst(%151 : memref<128xf32, #tpu.memory_space<vmem>>)
    %c6_i32_81 = arith.constant 6 : i32
    %c0_i32_82 = arith.constant 0 : i32
    %152 = tpu.memref_slice %arg2[%51, %c0_i32_82] : memref<128x128xf32, #tpu.memory_space<any>> -> memref<1x128xf32, #tpu.memory_space<any>>
    %153 = tpu.memref_squeeze %152 : memref<1x128xf32, #tpu.memory_space<any>> -> memref<128xf32, #tpu.memory_space<any>>
    %c0_i32_83 = arith.constant 0 : i32
    %154 = tpu.memref_slice %arg5[%c6_i32_81, %c0_i32_83] : memref<16x128xf32, #tpu.memory_space<vmem>> -> memref<1x128xf32, #tpu.memory_space<vmem>>
    %155 = tpu.memref_squeeze %154 : memref<1x128xf32, #tpu.memory_space<vmem>> -> memref<128xf32, #tpu.memory_space<vmem>>
    tpu.wait_dma2 semaphore(%arg6 : memref<!tpu.dma_semaphore, #tpu.memory_space<semaphore_mem>>) src(%153 : memref<128xf32, #tpu.memory_space<any>>) dst(%155 : memref<128xf32, #tpu.memory_space<vmem>>)
    %c7_i32_84 = arith.constant 7 : i32
    %c0_i32_85 = arith.constant 0 : i32
    %156 = tpu.memref_slice %arg2[%59, %c0_i32_85] : memref<128x128xf32, #tpu.memory_space<any>> -> memref<1x128xf32, #tpu.memory_space<any>>
    %157 = tpu.memref_squeeze %156 : memref<1x128xf32, #tpu.memory_space<any>> -> memref<128xf32, #tpu.memory_space<any>>
    %c0_i32_86 = arith.constant 0 : i32
    %158 = tpu.memref_slice %arg5[%c7_i32_84, %c0_i32_86] : memref<16x128xf32, #tpu.memory_space<vmem>> -> memref<1x128xf32, #tpu.memory_space<vmem>>
    %159 = tpu.memref_squeeze %158 : memref<1x128xf32, #tpu.memory_space<vmem>> -> memref<128xf32, #tpu.memory_space<vmem>>
    tpu.wait_dma2 semaphore(%arg6 : memref<!tpu.dma_semaphore, #tpu.memory_space<semaphore_mem>>) src(%157 : memref<128xf32, #tpu.memory_space<any>>) dst(%159 : memref<128xf32, #tpu.memory_space<vmem>>)
    %c8_i32_87 = arith.constant 8 : i32
    %c0_i32_88 = arith.constant 0 : i32
    %160 = tpu.memref_slice %arg2[%67, %c0_i32_88] : memref<128x128xf32, #tpu.memory_space<any>> -> memref<1x128xf32, #tpu.memory_space<any>>
    %161 = tpu.memref_squeeze %160 : memref<1x128xf32, #tpu.memory_space<any>> -> memref<128xf32, #tpu.memory_space<any>>
    %c0_i32_89 = arith.constant 0 : i32
    %162 = tpu.memref_slice %arg5[%c8_i32_87, %c0_i32_89] : memref<16x128xf32, #tpu.memory_space<vmem>> -> memref<1x128xf32, #tpu.memory_space<vmem>>
    %163 = tpu.memref_squeeze %162 : memref<1x128xf32, #tpu.memory_space<vmem>> -> memref<128xf32, #tpu.memory_space<vmem>>
    tpu.wait_dma2 semaphore(%arg6 : memref<!tpu.dma_semaphore, #tpu.memory_space<semaphore_mem>>) src(%161 : memref<128xf32, #tpu.memory_space<any>>) dst(%163 : memref<128xf32, #tpu.memory_space<vmem>>)
    %c9_i32_90 = arith.constant 9 : i32
    %c0_i32_91 = arith.constant 0 : i32
    %164 = tpu.memref_slice %arg2[%75, %c0_i32_91] : memref<128x128xf32, #tpu.memory_space<any>> -> memref<1x128xf32, #tpu.memory_space<any>>
    %165 = tpu.memref_squeeze %164 : memref<1x128xf32, #tpu.memory_space<any>> -> memref<128xf32, #tpu.memory_space<any>>
    %c0_i32_92 = arith.constant 0 : i32
    %166 = tpu.memref_slice %arg5[%c9_i32_90, %c0_i32_92] : memref<16x128xf32, #tpu.memory_space<vmem>> -> memref<1x128xf32, #tpu.memory_space<vmem>>
    %167 = tpu.memref_squeeze %166 : memref<1x128xf32, #tpu.memory_space<vmem>> -> memref<128xf32, #tpu.memory_space<vmem>>
    tpu.wait_dma2 semaphore(%arg6 : memref<!tpu.dma_semaphore, #tpu.memory_space<semaphore_mem>>) src(%165 : memref<128xf32, #tpu.memory_space<any>>) dst(%167 : memref<128xf32, #tpu.memory_space<vmem>>)
    %c10_i32_93 = arith.constant 10 : i32
    %c0_i32_94 = arith.constant 0 : i32
    %168 = tpu.memref_slice %arg2[%83, %c0_i32_94] : memref<128x128xf32, #tpu.memory_space<any>> -> memref<1x128xf32, #tpu.memory_space<any>>
    %169 = tpu.memref_squeeze %168 : memref<1x128xf32, #tpu.memory_space<any>> -> memref<128xf32, #tpu.memory_space<any>>
    %c0_i32_95 = arith.constant 0 : i32
    %170 = tpu.memref_slice %arg5[%c10_i32_93, %c0_i32_95] : memref<16x128xf32, #tpu.memory_space<vmem>> -> memref<1x128xf32, #tpu.memory_space<vmem>>
    %171 = tpu.memref_squeeze %170 : memref<1x128xf32, #tpu.memory_space<vmem>> -> memref<128xf32, #tpu.memory_space<vmem>>
    tpu.wait_dma2 semaphore(%arg6 : memref<!tpu.dma_semaphore, #tpu.memory_space<semaphore_mem>>) src(%169 : memref<128xf32, #tpu.memory_space<any>>) dst(%171 : memref<128xf32, #tpu.memory_space<vmem>>)
    %c11_i32_96 = arith.constant 11 : i32
    %c0_i32_97 = arith.constant 0 : i32
    %172 = tpu.memref_slice %arg2[%91, %c0_i32_97] : memref<128x128xf32, #tpu.memory_space<any>> -> memref<1x128xf32, #tpu.memory_space<any>>
    %173 = tpu.memref_squeeze %172 : memref<1x128xf32, #tpu.memory_space<any>> -> memref<128xf32, #tpu.memory_space<any>>
    %c0_i32_98 = arith.constant 0 : i32
    %174 = tpu.memref_slice %arg5[%c11_i32_96, %c0_i32_98] : memref<16x128xf32, #tpu.memory_space<vmem>> -> memref<1x128xf32, #tpu.memory_space<vmem>>
    %175 = tpu.memref_squeeze %174 : memref<1x128xf32, #tpu.memory_space<vmem>> -> memref<128xf32, #tpu.memory_space<vmem>>
    tpu.wait_dma2 semaphore(%arg6 : memref<!tpu.dma_semaphore, #tpu.memory_space<semaphore_mem>>) src(%173 : memref<128xf32, #tpu.memory_space<any>>) dst(%175 : memref<128xf32, #tpu.memory_space<vmem>>)
    %c12_i32_99 = arith.constant 12 : i32
    %c0_i32_100 = arith.constant 0 : i32
    %176 = tpu.memref_slice %arg2[%99, %c0_i32_100] : memref<128x128xf32, #tpu.memory_space<any>> -> memref<1x128xf32, #tpu.memory_space<any>>
    %177 = tpu.memref_squeeze %176 : memref<1x128xf32, #tpu.memory_space<any>> -> memref<128xf32, #tpu.memory_space<any>>
    %c0_i32_101 = arith.constant 0 : i32
    %178 = tpu.memref_slice %arg5[%c12_i32_99, %c0_i32_101] : memref<16x128xf32, #tpu.memory_space<vmem>> -> memref<1x128xf32, #tpu.memory_space<vmem>>
    %179 = tpu.memref_squeeze %178 : memref<1x128xf32, #tpu.memory_space<vmem>> -> memref<128xf32, #tpu.memory_space<vmem>>
    tpu.wait_dma2 semaphore(%arg6 : memref<!tpu.dma_semaphore, #tpu.memory_space<semaphore_mem>>) src(%177 : memref<128xf32, #tpu.memory_space<any>>) dst(%179 : memref<128xf32, #tpu.memory_space<vmem>>)
    %c13_i32_102 = arith.constant 13 : i32
    %c0_i32_103 = arith.constant 0 : i32
    %180 = tpu.memref_slice %arg2[%107, %c0_i32_103] : memref<128x128xf32, #tpu.memory_space<any>> -> memref<1x128xf32, #tpu.memory_space<any>>
    %181 = tpu.memref_squeeze %180 : memref<1x128xf32, #tpu.memory_space<any>> -> memref<128xf32, #tpu.memory_space<any>>
    %c0_i32_104 = arith.constant 0 : i32
    %182 = tpu.memref_slice %arg5[%c13_i32_102, %c0_i32_104] : memref<16x128xf32, #tpu.memory_space<vmem>> -> memref<1x128xf32, #tpu.memory_space<vmem>>
    %183 = tpu.memref_squeeze %182 : memref<1x128xf32, #tpu.memory_space<vmem>> -> memref<128xf32, #tpu.memory_space<vmem>>
    tpu.wait_dma2 semaphore(%arg6 : memref<!tpu.dma_semaphore, #tpu.memory_space<semaphore_mem>>) src(%181 : memref<128xf32, #tpu.memory_space<any>>) dst(%183 : memref<128xf32, #tpu.memory_space<vmem>>)
    %c14_i32_105 = arith.constant 14 : i32
    %c0_i32_106 = arith.constant 0 : i32
    %184 = tpu.memref_slice %arg2[%115, %c0_i32_106] : memref<128x128xf32, #tpu.memory_space<any>> -> memref<1x128xf32, #tpu.memory_space<any>>
    %185 = tpu.memref_squeeze %184 : memref<1x128xf32, #tpu.memory_space<any>> -> memref<128xf32, #tpu.memory_space<any>>
    %c0_i32_107 = arith.constant 0 : i32
    %186 = tpu.memref_slice %arg5[%c14_i32_105, %c0_i32_107] : memref<16x128xf32, #tpu.memory_space<vmem>> -> memref<1x128xf32, #tpu.memory_space<vmem>>
    %187 = tpu.memref_squeeze %186 : memref<1x128xf32, #tpu.memory_space<vmem>> -> memref<128xf32, #tpu.memory_space<vmem>>
    tpu.wait_dma2 semaphore(%arg6 : memref<!tpu.dma_semaphore, #tpu.memory_space<semaphore_mem>>) src(%185 : memref<128xf32, #tpu.memory_space<any>>) dst(%187 : memref<128xf32, #tpu.memory_space<vmem>>)
    %c15_i32_108 = arith.constant 15 : i32
    %c0_i32_109 = arith.constant 0 : i32
    %188 = tpu.memref_slice %arg2[%123, %c0_i32_109] : memref<128x128xf32, #tpu.memory_space<any>> -> memref<1x128xf32, #tpu.memory_space<any>>
    %189 = tpu.memref_squeeze %188 : memref<1x128xf32, #tpu.memory_space<any>> -> memref<128xf32, #tpu.memory_space<any>>
    %c0_i32_110 = arith.constant 0 : i32
    %190 = tpu.memref_slice %arg5[%c15_i32_108, %c0_i32_110] : memref<16x128xf32, #tpu.memory_space<vmem>> -> memref<1x128xf32, #tpu.memory_space<vmem>>
    %191 = tpu.memref_squeeze %190 : memref<1x128xf32, #tpu.memory_space<vmem>> -> memref<128xf32, #tpu.memory_space<vmem>>
    tpu.wait_dma2 semaphore(%arg6 : memref<!tpu.dma_semaphore, #tpu.memory_space<semaphore_mem>>) src(%189 : memref<128xf32, #tpu.memory_space<any>>) dst(%191 : memref<128xf32, #tpu.memory_space<vmem>>)
    %c0 = arith.constant 0 : index
    %c0_111 = arith.constant 0 : index
    %192 = vector.load %arg5[%c0, %c0_111] : memref<16x128xf32, #tpu.memory_space<vmem>>, vector<16x128xf32>
    %cst = arith.constant 11.3137083 : f32
    %193 = vector.broadcast %cst : f32 to vector<16x128xf32>
    %194 = arith.mulf %192, %193 : vector<16x128xf32>
    %c0_112 = arith.constant 0 : index
    %c0_113 = arith.constant 0 : index
    %195 = vector.load %arg3[%c0_112, %c0_113] : memref<16x128xf32, #tpu.memory_space<vmem>>, vector<16x128xf32>
    %196 = arith.addf %194, %195 : vector<16x128xf32>
    %c0_114 = arith.constant 0 : index
    %c0_115 = arith.constant 0 : index
    %197 = vector.load %arg4[%c0_114, %c0_115] : memref<16x128xf32, #tpu.memory_space<vmem>>, vector<16x128xf32>
    tpu.vector_store %arg4[%c0_114, %c0_115], %196 {strides = array<i32>} : memref<16x128xf32, #tpu.memory_space<vmem>>, vector<16x128xf32>,
    return
  }
  func.func @transform_1(%arg0: i32, %arg1: memref<32xi32, #tpu.memory_space<smem>>) -> (i32, i32) {
    %c0_i32 = arith.constant 0 : i32
    %c0_i32_0 = arith.constant 0 : i32
    %c0_i32_1 = arith.constant 0 : i32
    return %c0_i32, %c0_i32_0 : i32, i32
  }
  func.func @transform_2(%arg0: i32, %arg1: memref<32xi32, #tpu.memory_space<smem>>) -> (i32, i32) {
    %c0_i32 = arith.constant 0 : i32
    %c0_i32_0 = arith.constant 0 : i32
    return %arg0, %c0_i32 : i32, i32
  }
}

</mosaic_0001>

<llo_original>
// kernel: tpu_custom_call.1
$region0: #{tpu_custom_call.1}
  #allocation0 [shape = 'u32[]', space=smem, size = 0x4, offset = 0x4, fixed_abs, tag = 'smem constant byte address 0x4 - core index']
  #allocation1 [shape = 'u32[144,128]{1,0:T(1,128)}', space=vmem, size = 0x12000, scoped, tag = 'internal scratch']
  #allocation2 [shape = 'f32[16,128]{1,0:T(8,128)}', space=vmem, size = 0x2000, scoped, tag = 'scratch operand']
  #allocation3 [shape = 's32[1]{0}', space=sflag, size = 0x4, scoped, tag = 'scratch operand']
  #allocation4 [shape = 's32[1]{0}', space=sflag, size = 0x4, scoped, tag = 'scoped memory for tpu_custom_call.1']
  #allocation5 [shape = 'u8[512]{0}', space=smem, size = 0x200, scoped, tag = 'prefetched SMEM operand 0']
  #allocation10 [shape = 's32[]', space=sflag, size = 0x4, offset = 0, fixed_abs, tag = 'sflag constant byte address 0x0 - dummy sync flag']
  #allocation11 [shape = 's32[]', space=sflag, size = 0x4, offset = 0, fixed_abs, tag = 'sflag constant byte address 0x0 - dummy sync flag']
  #allocation12 [shape = 'u32[]', space=smem, size = 0x4, offset = 0x44, fixed_abs, tag = 'smem constant byte address 0x44 - assertion arg 0']
  #allocation13 [shape = 'u32[]', space=smem, size = 0x4, offset = 0x48, fixed_abs, tag = 'smem constant byte address 0x48 - assertion arg 1']
  #allocation14 [shape = 's32[]', space=sflag, size = 0x4, offset = 0, fixed_abs, tag = 'sflag constant byte address 0x0 - dummy sync flag']
  #allocation15 [shape = 's32[]', space=sflag, size = 0x4, offset = 0, fixed_abs, tag = 'sflag constant byte address 0x0 - dummy sync flag']
  #allocation16 [shape = 's32[]', space=sflag, size = 0x4, offset = 0, fixed_abs, tag = 'sflag constant byte address 0x0 - dummy sync flag']
  #allocation17 [shape = 's32[]', space=sflag, size = 0x4, offset = 0, fixed_abs, tag = 'sflag constant byte address 0x0 - dummy sync flag']
  #allocation18 [shape = 's32[]', space=sflag, size = 0x4, offset = 0, fixed_abs, tag = 'sflag constant byte address 0x0 - dummy sync flag']
  #allocation19 [shape = 's32[]', space=sflag, size = 0x4, offset = 0, fixed_abs, tag = 'sflag constant byte address 0x0 - dummy sync flag']
  #allocation20 [shape = 's32[]', space=sflag, size = 0x4, offset = 0, fixed_abs, tag = 'sflag constant byte address 0x0 - dummy sync flag']
  #allocation21 [shape = 's32[]', space=sflag, size = 0x4, offset = 0, fixed_abs, tag = 'sflag constant byte address 0x0 - dummy sync flag']
  #allocation22 [shape = 's32[]', space=sflag, size = 0x4, offset = 0, fixed_abs, tag = 'sflag constant byte address 0x0 - dummy sync flag']
  #allocation23 [shape = 's32[]', space=sflag, size = 0x4, offset = 0, fixed_abs, tag = 'sflag constant byte address 0x0 - dummy sync flag']
  #allocation24 [shape = 's32[]', space=sflag, size = 0x4, offset = 0, fixed_abs, tag = 'sflag constant byte address 0x0 - dummy sync flag']
  #allocation25 [shape = 's32[]', space=sflag, size = 0x4, offset = 0, fixed_abs, tag = 'sflag constant byte address 0x0 - dummy sync flag']
  #allocation26 [shape = 's32[]', space=sflag, size = 0x4, offset = 0, fixed_abs, tag = 'sflag constant byte address 0x0 - dummy sync flag']
  #allocation27 [shape = 's32[]', space=sflag, size = 0x4, offset = 0, fixed_abs, tag = 'sflag constant byte address 0x0 - dummy sync flag']
  #allocation28 [shape = 's32[]', space=sflag, size = 0x4, offset = 0, fixed_abs, tag = 'sflag constant byte address 0x0 - dummy sync flag']
  #allocation29 [shape = 's32[]', space=sflag, size = 0x4, offset = 0, fixed_abs, tag = 'sflag constant byte address 0x0 - dummy sync flag']
  #allocation30 [shape = 's32[]', space=sflag, size = 0x4, offset = 0, fixed_abs, tag = 'sflag constant byte address 0x0 - dummy sync flag']
  #allocation31 [shape = 's32[]', space=sflag, size = 0x4, offset = 0, fixed_abs, tag = 'sflag constant byte address 0x0 - dummy sync flag']
  #allocation32 [shape = 's32[]', space=sflag, size = 0x4, offset = 0, fixed_abs, tag = 'sflag constant byte address 0x0 - dummy sync flag']
  #allocation33 [shape = 's32[]', space=sflag, size = 0x4, offset = 0, fixed_abs, tag = 'sflag constant byte address 0x0 - dummy sync flag']
  #allocation34 [shape = 's32[]', space=sflag, size = 0x4, offset = 0, fixed_abs, tag = 'sflag constant byte address 0x0 - dummy sync flag']
  #allocation35 [shape = 's32[]', space=sflag, size = 0x4, offset = 0, fixed_abs, tag = 'sflag constant byte address 0x0 - dummy sync flag']
  #allocation36 [shape = 's32[]', space=sflag, size = 0x4, offset = 0, fixed_abs, tag = 'sflag constant byte address 0x0 - dummy sync flag']
  #allocation37 [shape = 's32[]', space=sflag, size = 0x4, offset = 0, fixed_abs, tag = 'sflag constant byte address 0x0 - dummy sync flag']
  #allocation38 [shape = 's32[]', space=sflag, size = 0x4, offset = 0, fixed_abs, tag = 'sflag constant byte address 0x0 - dummy sync flag']
  #allocation39 [shape = 's32[]', space=sflag, size = 0x4, offset = 0, fixed_abs, tag = 'sflag constant byte address 0x0 - dummy sync flag']
  #allocation40 [shape = 's32[]', space=sflag, size = 0x4, offset = 0, fixed_abs, tag = 'sflag constant byte address 0x0 - dummy sync flag']
  #allocation41 [shape = 's32[]', space=sflag, size = 0x4, offset = 0, fixed_abs, tag = 'sflag constant byte address 0x0 - dummy sync flag']
  #allocation42 [shape = 's32[]', space=sflag, size = 0x4, offset = 0, fixed_abs, tag = 'sflag constant byte address 0x0 - dummy sync flag']
  #allocation43 [shape = 's32[]', space=sflag, size = 0x4, offset = 0, fixed_abs, tag = 'sflag constant byte address 0x0 - dummy sync flag']
  %s0 = inlined_call_operand.hbm [shape: s32[32], index: 0, kind: input, shape index: {}]
  %s1 = inlined_call_operand.hbm [shape: f32[128,128], index: 1, kind: input, shape index: {}]
  %s2 = inlined_call_operand.hbm [shape: f32[16,128], index: 2, kind: input, shape index: {}]
  %s3 = inlined_call_operand.hbm [shape: f32[32,128], index: 3, kind: output, shape index: {}]
  %s4 = sld [smem:[#allocation0]]
  $region105: #{tpu_custom_call.1} parent=0
    _
  %s6 = ssub.s32 1, %s4
  %s7 = scalar_select 0, %s6, %s4
  %9 = dma.hbm_to_smem %s0, 16, [#allocation5], [#allocation4]
  %10 = dma.done [#allocation4], 16
  %11 = sfence
  $region1: #{tpu_custom_call.1} parent=0
    #allocation6 [shape = 'u8[8192]{0}', space=vmem, size = 0x2000, scoped, tag = 'input window, operand 2, single buffered']
    #allocation7 [shape = 's32[2]{0}', space=sflag, size = 0x8, scoped, tag = 'scoped memory for tpu_custom_call.1']
    #allocation8 [shape = 's32[2]{0}', space=sflag, size = 0x8, scoped, tag = 'scoped memory for tpu_custom_call.1']
    #allocation9 [shape = 'u8[16384]{0}', space=vmem, size = 0x4000, scoped, tag = 'output window, operand 0']
    %12 = vsyncpa [#allocation7], 0
    %13 = vsyncpa [#allocation8], 0
    %s14 = scalar_lea.sflag [#allocation8], 1
    %15 = vsyncpa %s14, 0
    loop: start=0, step=1, limit=4
    $region2: #{tpu_custom_call.1} parent=1 // loop_pre_header
      _
    $region3: #{tpu_custom_call.1} parent=1 // loop_header
      %s17 = sphi 0, %s21
      %p18 = scmp.ge.s32.totalorder %s17, 4
      %s25 = sphi 0, %s25
      %s27 = sphi 0, %s25
      %s28 = sphi 0, %s27
      %s42 = sphi 0, %s28
      %s48 = sphi 0, %s50
      %s51 = sphi 0, %s48
      %s52 = sphi 0, %s51
      %s68 = sphi 0, %s52
    $region4: #{tpu_custom_call.1} parent=1 // loop_header_branch
      %20 = sbr.rel (%p18) target = $region8
    $region5: #{tpu_custom_call.1} parent=1 // loop_body
      %s22 = ssub.s32 %s17, 1
      %s23 = ssub.s32 %s17, 2
      %s24 = sadd.s32 %s17, 1
      %s26 = sadd.s32 %s25, 1
      %p29 = scmp.eq.s32.totalorder %s17, 1
      %p30 = scmp.ne.s32.totalorder %s25, %s27
      %p31 = scmp.eq.s32.totalorder %s17, 0
      %p32 = por %p30, %p31
      %p33 = scmp.ne.s32.totalorder %s25, %s27
      %p34 = scmp.eq.s32.totalorder %s22, 1
      %p35 = por %p33, %p34
      %p36 = scmp.ne.s32.totalorder %s27, %s28
      %p37 = scmp.eq.s32.totalorder %s22, 0
      %p38 = por %p36, %p37
      %p39 = scmp.ne.s32.totalorder %s27, %s28
      %p40 = scmp.eq.s32.totalorder %s23, 1
      %p41 = por %p39, %p40
      %p43 = scmp.ne.s32.totalorder %s28, %s42
      %p44 = scmp.eq.s32.totalorder %s23, 0
      %p45 = por %p43, %p44
      %s46 = ssub.s32 %s17, %s24
      %p47 = scmp.eq.s32.totalorder %s46, 0
      %s49 = sadd.s32 %s48, 1
      %s50 = scalar_select %p47, %s48, %s49
      %p53 = pneg %p47
      %p54 = scmp.eq.s32.totalorder %s17, 1
      %p55 = por %p53, %p54
      %p56 = scmp.ne.s32.totalorder %s48, %s51
      %p57 = scmp.eq.s32.totalorder %s17, 0
      %p58 = por %p56, %p57
      %p59 = scmp.ne.s32.totalorder %s48, %s51
      %p60 = scmp.eq.s32.totalorder %s22, 1
      %p61 = por %p59, %p60
      %p62 = scmp.ne.s32.totalorder %s51, %s52
      %p63 = scmp.eq.s32.totalorder %s22, 0
      %p64 = por %p62, %p63
      %p65 = scmp.ne.s32.totalorder %s51, %s52
      %p66 = scmp.eq.s32.totalorder %s23, 1
      %p67 = por %p65, %p66
      %p69 = scmp.ne.s32.totalorder %s52, %s68
      %p70 = scmp.eq.s32.totalorder %s23, 0
      %p71 = por %p69, %p70
      %p72 = scmp.le.s32.totalorder 1, %s17
      %p73 = scmp.lt.s32.totalorder %s17, 3
      %p74 = pnand %p72, %p73
      %p75 = pneg %p74
      // Predicated region
      $region9: #{tpu_custom_call.1} parent=5 // pred_check
        _
      $region10: #{tpu_custom_call.1} parent=5 // pred_check_branch
        %77 = sbr.rel (%p74) target = $region12
      $region11: #{tpu_custom_call.1} parent=5 // pred_region
        %s78 = ssub.s32 %s17, 1
        // Predicated region
        $region13: #{tpu_custom_call.1} parent=11 // pred_check
          %p79 = pneg %p38
        $region14: #{tpu_custom_call.1} parent=11 // pred_check_branch
          %81 = sbr.rel (%p79) target = $region16
        $region15: #{tpu_custom_call.1} parent=11 // pred_region
          %s83 = ssub.s32 256, 256
          %84 = vsyncadd [#allocation7], %s83
          %s85 = sshll.u32 [#allocation6], 4
          %s86 = int_to_ptr.vmem [resolvable:$true] %s85
          %91 = dma.hbm_to_vmem [thread:$0]  %s2, 256, %s86, [#allocation7], 128, 128, 8
        $region16: #{tpu_custom_call.1} parent=11 // pred_fallthru
          _
      $region12: #{tpu_custom_call.1} parent=5 // pred_fallthru
        _
      %p92 = scmp.lt.s32.totalorder %s17, 2
      // Predicated region
      $region17: #{tpu_custom_call.1} parent=5 // pred_check
        %p93 = pneg %p92
      $region18: #{tpu_custom_call.1} parent=5 // pred_check_branch
        %95 = sbr.rel (%p93) target = $region20
      $region19: #{tpu_custom_call.1} parent=5 // pred_region
        _
      $region20: #{tpu_custom_call.1} parent=5 // pred_fallthru
        _
      %p96 = scmp.le.s32.totalorder 1, %s17
      %p97 = scmp.lt.s32.totalorder %s17, 3
      %p98 = pnand %p96, %p97
      %p99 = pneg %p98
      // Predicated region
      $region21: #{tpu_custom_call.1} parent=5 // pred_check
        _
      $region22: #{tpu_custom_call.1} parent=5 // pred_check_branch
        %101 = sbr.rel (%p98) target = $region24
      $region23: #{tpu_custom_call.1} parent=5 // pred_region
        %s102 = ssub.s32 %s17, 1
        // Predicated region
        $region25: #{tpu_custom_call.1} parent=23 // pred_check
          %p103 = pneg %p38
        $region26: #{tpu_custom_call.1} parent=23 // pred_check_branch
          %105 = sbr.rel (%p103) target = $region28
        $region27: #{tpu_custom_call.1} parent=23 // pred_region
          %106 = dma.done [#allocation7], 256
        $region28: #{tpu_custom_call.1} parent=23 // pred_fallthru
          _
        %p107 = pneg %p38
        %p108 = pneg %p35
        %p109 = pneg %p64
        %p110 = pneg %p61
        %s111 = sand.u32 %s51, 1
        %s112 = scalar_lea.sflag [#allocation8], %s111
        %s113 = sand.u32 %s51, 1
        %s114 = smul.addr %s113, 16
        %s115 = scalar_lea.vmem [#allocation9], %s114
        %s116 = smul.u32 2, %s22
        %s117 = smul.u32 %s22, 16
        %s118 = sld [smem:[#allocation5 + %s117]]
        %s119 = smul.addr %s118, 16
        %s120 = scalar_lea.hbm %s1, %s119
        // Predicated region
        $region29: #{tpu_custom_call.1} parent=23 // pred_check
          _
        $region30: #{tpu_custom_call.1} parent=23 // pred_check_branch
          %122 = sbr.rel target = $region32
        $region31: #{tpu_custom_call.1} parent=23 // pred_region
          %123 = sst [smem:[#allocation12]] [#allocation11]
          %124 = sst [smem:[#allocation13]] [#allocation10]
        $region32: #{tpu_custom_call.1} parent=23 // pred_fallthru
          _
        %126 = shalt.err (0)
        %s128 = sshll.u32 [#allocation2], 4
        %s129 = int_to_ptr.vmem [resolvable:$true] %s128
        %131 = dma.hbm_to_vmem [thread:$0]  %s120, 16, %s129, [#allocation3]
        %s132 = sadd.s32 %s117, 1
        %s133 = sld [smem:[#allocation5 + %s132]]
        %s134 = smul.addr %s133, 16
        %s135 = scalar_lea.hbm %s1, %s134
        %s136 = scalar_lea.vmem [#allocation2], 1
        // Predicated region
        $region33: #{tpu_custom_call.1} parent=23 // pred_check
          _
        $region34: #{tpu_custom_call.1} parent=23 // pred_check_branch
          %138 = sbr.rel target = $region36
        $region35: #{tpu_custom_call.1} parent=23 // pred_region
          %139 = sst [smem:[#allocation12]] [#allocation15]
          %140 = sst [smem:[#allocation13]] [#allocation14]
        $region36: #{tpu_custom_call.1} parent=23 // pred_fallthru
          _
        %142 = shalt.err (0)
        %s144 = sshll.u32 %s136, 4
        %s145 = int_to_ptr.vmem [resolvable:$true] %s144
        %147 = dma.hbm_to_vmem [thread:$0]  %s135, 16, %s145, [#allocation3]
        %s148 = sadd.s32 %s117, 2
        %s149 = sld [smem:[#allocation5 + %s148]]
        %s150 = smul.addr %s149, 16
        %s151 = scalar_lea.hbm %s1, %s150
        %s152 = scalar_lea.vmem [#allocation2], 2
        // Predicated region
        $region37: #{tpu_custom_call.1} parent=23 // pred_check
          _
        $region38: #{tpu_custom_call.1} parent=23 // pred_check_branch
          %154 = sbr.rel target = $region40
        $region39: #{tpu_custom_call.1} parent=23 // pred_region
          %155 = sst [smem:[#allocation12]] [#allocation17]
          %156 = sst [smem:[#allocation13]] [#allocation16]
        $region40: #{tpu_custom_call.1} parent=23 // pred_fallthru
          _
        %158 = shalt.err (0)
        %s160 = sshll.u32 %s152, 4
        %s161 = int_to_ptr.vmem [resolvable:$true] %s160
        %163 = dma.hbm_to_vmem [thread:$0]  %s151, 16, %s161, [#allocation3]
        %s164 = sadd.s32 %s117, 3
        %s165 = sld [smem:[#allocation5 + %s164]]
        %s166 = smul.addr %s165, 16
        %s167 = scalar_lea.hbm %s1, %s166
        %s168 = scalar_lea.vmem [#allocation2], 3
        // Predicated region
        $region41: #{tpu_custom_call.1} parent=23 // pred_check
          _
        $region42: #{tpu_custom_call.1} parent=23 // pred_check_branch
          %170 = sbr.rel target = $region44
        $region43: #{tpu_custom_call.1} parent=23 // pred_region
          %171 = sst [smem:[#allocation12]] [#allocation19]
          %172 = sst [smem:[#allocation13]] [#allocation18]
        $region44: #{tpu_custom_call.1} parent=23 // pred_fallthru
          _
        %174 = shalt.err (0)
        %s176 = sshll.u32 %s168, 4
        %s177 = int_to_ptr.vmem [resolvable:$true] %s176
        %179 = dma.hbm_to_vmem [thread:$0]  %s167, 16, %s177, [#allocation3]
        %s180 = sadd.s32 %s117, 4
        %s181 = sld [smem:[#allocation5 + %s180]]
        %s182 = smul.addr %s181, 16
        %s183 = scalar_lea.hbm %s1, %s182
        %s184 = scalar_lea.vmem [#allocation2], 4
        // Predicated region
        $region45: #{tpu_custom_call.1} parent=23 // pred_check
          _
        $region46: #{tpu_custom_call.1} parent=23 // pred_check_branch
          %186 = sbr.rel target = $region48
        $region47: #{tpu_custom_call.1} parent=23 // pred_region
          %187 = sst [smem:[#allocation12]] [#allocation21]
          %188 = sst [smem:[#allocation13]] [#allocation20]
        $region48: #{tpu_custom_call.1} parent=23 // pred_fallthru
          _
        %190 = shalt.err (0)
        %s192 = sshll.u32 %s184, 4
        %s193 = int_to_ptr.vmem [resolvable:$true] %s192
        %195 = dma.hbm_to_vmem [thread:$0]  %s183, 16, %s193, [#allocation3]
        %s196 = sadd.s32 %s117, 5
        %s197 = sld [smem:[#allocation5 + %s196]]
        %s198 = smul.addr %s197, 16
        %s199 = scalar_lea.hbm %s1, %s198
        %s200 = scalar_lea.vmem [#allocation2], 5
        // Predicated region
        $region49: #{tpu_custom_call.1} parent=23 // pred_check
          _
        $region50: #{tpu_custom_call.1} parent=23 // pred_check_branch
          %202 = sbr.rel target = $region52
        $region51: #{tpu_custom_call.1} parent=23 // pred_region
          %203 = sst [smem:[#allocation12]] [#allocation23]
          %204 = sst [smem:[#allocation13]] [#allocation22]
        $region52: #{tpu_custom_call.1} parent=23 // pred_fallthru
          _
        %206 = shalt.err (0)
        %s208 = sshll.u32 %s200, 4
        %s209 = int_to_ptr.vmem [resolvable:$true] %s208
        %211 = dma.hbm_to_vmem [thread:$0]  %s199, 16, %s209, [#allocation3]
        %s212 = sadd.s32 %s117, 6
        %s213 = sld [smem:[#allocation5 + %s212]]
        %s214 = smul.addr %s213, 16
        %s215 = scalar_lea.hbm %s1, %s214
        %s216 = scalar_lea.vmem [#allocation2], 6
        // Predicated region
        $region53: #{tpu_custom_call.1} parent=23 // pred_check
          _
        $region54: #{tpu_custom_call.1} parent=23 // pred_check_branch
          %218 = sbr.rel target = $region56
        $region55: #{tpu_custom_call.1} parent=23 // pred_region
          %219 = sst [smem:[#allocation12]] [#allocation25]
          %220 = sst [smem:[#allocation13]] [#allocation24]
        $region56: #{tpu_custom_call.1} parent=23 // pred_fallthru
          _
        %222 = shalt.err (0)
        %s224 = sshll.u32 %s216, 4
        %s225 = int_to_ptr.vmem [resolvable:$true] %s224
        %227 = dma.hbm_to_vmem [thread:$0]  %s215, 16, %s225, [#allocation3]
        %s228 = sadd.s32 %s117, 7
        %s229 = sld [smem:[#allocation5 + %s228]]
        %s230 = smul.addr %s229, 16
        %s231 = scalar_lea.hbm %s1, %s230
        %s232 = scalar_lea.vmem [#allocation2], 7
        // Predicated region
        $region57: #{tpu_custom_call.1} parent=23 // pred_check
          _
        $region58: #{tpu_custom_call.1} parent=23 // pred_check_branch
          %234 = sbr.rel target = $region60
        $region59: #{tpu_custom_call.1} parent=23 // pred_region
          %235 = sst [smem:[#allocation12]] [#allocation27]
          %236 = sst [smem:[#allocation13]] [#allocation26]
        $region60: #{tpu_custom_call.1} parent=23 // pred_fallthru
          _
        %238 = shalt.err (0)
        %s240 = sshll.u32 %s232, 4
        %s241 = int_to_ptr.vmem [resolvable:$true] %s240
        %243 = dma.hbm_to_vmem [thread:$0]  %s231, 16, %s241, [#allocation3]
        %s244 = sadd.s32 %s117, 8
        %s245 = sld [smem:[#allocation5 + %s244]]
        %s246 = smul.addr %s245, 16
        %s247 = scalar_lea.hbm %s1, %s246
        %s248 = scalar_lea.vmem [#allocation2], 8
        // Predicated region
        $region61: #{tpu_custom_call.1} parent=23 // pred_check
          _
        $region62: #{tpu_custom_call.1} parent=23 // pred_check_branch
          %250 = sbr.rel target = $region64
        $region63: #{tpu_custom_call.1} parent=23 // pred_region
          %251 = sst [smem:[#allocation12]] [#allocation29]
          %252 = sst [smem:[#allocation13]] [#allocation28]
        $region64: #{tpu_custom_call.1} parent=23 // pred_fallthru
          _
        %254 = shalt.err (0)
        %s256 = sshll.u32 %s248, 4
        %s257 = int_to_ptr.vmem [resolvable:$true] %s256
        %259 = dma.hbm_to_vmem [thread:$0]  %s247, 16, %s257, [#allocation3]
        %s260 = sadd.s32 %s117, 9
        %s261 = sld [smem:[#allocation5 + %s260]]
        %s262 = smul.addr %s261, 16
        %s263 = scalar_lea.hbm %s1, %s262
        %s264 = scalar_lea.vmem [#allocation2], 9
        // Predicated region
        $region65: #{tpu_custom_call.1} parent=23 // pred_check
          _
        $region66: #{tpu_custom_call.1} parent=23 // pred_check_branch
          %266 = sbr.rel target = $region68
        $region67: #{tpu_custom_call.1} parent=23 // pred_region
          %267 = sst [smem:[#allocation12]] [#allocation31]
          %268 = sst [smem:[#allocation13]] [#allocation30]
        $region68: #{tpu_custom_call.1} parent=23 // pred_fallthru
          _
        %270 = shalt.err (0)
        %s272 = sshll.u32 %s264, 4
        %s273 = int_to_ptr.vmem [resolvable:$true] %s272
        %275 = dma.hbm_to_vmem [thread:$0]  %s263, 16, %s273, [#allocation3]
        %s276 = sadd.s32 %s117, 10
        %s277 = sld [smem:[#allocation5 + %s276]]
        %s278 = smul.addr %s277, 16
        %s279 = scalar_lea.hbm %s1, %s278
        %s280 = scalar_lea.vmem [#allocation2], 10
        // Predicated region
        $region69: #{tpu_custom_call.1} parent=23 // pred_check
          _
        $region70: #{tpu_custom_call.1} parent=23 // pred_check_branch
          %282 = sbr.rel target = $region72
        $region71: #{tpu_custom_call.1} parent=23 // pred_region
          %283 = sst [smem:[#allocation12]] [#allocation33]
          %284 = sst [smem:[#allocation13]] [#allocation32]
        $region72: #{tpu_custom_call.1} parent=23 // pred_fallthru
          _
        %286 = shalt.err (0)
        %s288 = sshll.u32 %s280, 4
        %s289 = int_to_ptr.vmem [resolvable:$true] %s288
        %291 = dma.hbm_to_vmem [thread:$0]  %s279, 16, %s289, [#allocation3]
        %s292 = sadd.s32 %s117, 11
        %s293 = sld [smem:[#allocation5 + %s292]]
        %s294 = smul.addr %s293, 16
        %s295 = scalar_lea.hbm %s1, %s294
        %s296 = scalar_lea.vmem [#allocation2], 11
        // Predicated region
        $region73: #{tpu_custom_call.1} parent=23 // pred_check
          _
        $region74: #{tpu_custom_call.1} parent=23 // pred_check_branch
          %298 = sbr.rel target = $region76
        $region75: #{tpu_custom_call.1} parent=23 // pred_region
          %299 = sst [smem:[#allocation12]] [#allocation35]
          %300 = sst [smem:[#allocation13]] [#allocation34]
        $region76: #{tpu_custom_call.1} parent=23 // pred_fallthru
          _
        %302 = shalt.err (0)
        %s304 = sshll.u32 %s296, 4
        %s305 = int_to_ptr.vmem [resolvable:$true] %s304
        %307 = dma.hbm_to_vmem [thread:$0]  %s295, 16, %s305, [#allocation3]
        %s308 = sadd.s32 %s117, 12
        %s309 = sld [smem:[#allocation5 + %s308]]
        %s310 = smul.addr %s309, 16
        %s311 = scalar_lea.hbm %s1, %s310
        %s312 = scalar_lea.vmem [#allocation2], 12
        // Predicated region
        $region77: #{tpu_custom_call.1} parent=23 // pred_check
          _
        $region78: #{tpu_custom_call.1} parent=23 // pred_check_branch
          %314 = sbr.rel target = $region80
        $region79: #{tpu_custom_call.1} parent=23 // pred_region
          %315 = sst [smem:[#allocation12]] [#allocation37]
          %316 = sst [smem:[#allocation13]] [#allocation36]
        $region80: #{tpu_custom_call.1} parent=23 // pred_fallthru
          _
        %318 = shalt.err (0)
        %s320 = sshll.u32 %s312, 4
        %s321 = int_to_ptr.vmem [resolvable:$true] %s320
        %323 = dma.hbm_to_vmem [thread:$0]  %s311, 16, %s321, [#allocation3]
        %s324 = sadd.s32 %s117, 13
        %s325 = sld [smem:[#allocation5 + %s324]]
        %s326 = smul.addr %s325, 16
        %s327 = scalar_lea.hbm %s1, %s326
        %s328 = scalar_lea.vmem [#allocation2], 13
        // Predicated region
        $region81: #{tpu_custom_call.1} parent=23 // pred_check
          _
        $region82: #{tpu_custom_call.1} parent=23 // pred_check_branch
          %330 = sbr.rel target = $region84
        $region83: #{tpu_custom_call.1} parent=23 // pred_region
          %331 = sst [smem:[#allocation12]] [#allocation39]
          %332 = sst [smem:[#allocation13]] [#allocation38]
        $region84: #{tpu_custom_call.1} parent=23 // pred_fallthru
          _
        %334 = shalt.err (0)
        %s336 = sshll.u32 %s328, 4
        %s337 = int_to_ptr.vmem [resolvable:$true] %s336
        %339 = dma.hbm_to_vmem [thread:$0]  %s327, 16, %s337, [#allocation3]
        %s340 = sadd.s32 %s117, 14
        %s341 = sld [smem:[#allocation5 + %s340]]
        %s342 = smul.addr %s341, 16
        %s343 = scalar_lea.hbm %s1, %s342
        %s344 = scalar_lea.vmem [#allocation2], 14
        // Predicated region
        $region85: #{tpu_custom_call.1} parent=23 // pred_check
          _
        $region86: #{tpu_custom_call.1} parent=23 // pred_check_branch
          %346 = sbr.rel target = $region88
        $region87: #{tpu_custom_call.1} parent=23 // pred_region
          %347 = sst [smem:[#allocation12]] [#allocation41]
          %348 = sst [smem:[#allocation13]] [#allocation40]
        $region88: #{tpu_custom_call.1} parent=23 // pred_fallthru
          _
        %350 = shalt.err (0)
        %s352 = sshll.u32 %s344, 4
        %s353 = int_to_ptr.vmem [resolvable:$true] %s352
        %355 = dma.hbm_to_vmem [thread:$0]  %s343, 16, %s353, [#allocation3]
        %s356 = sadd.s32 %s117, 15
        %s357 = sld [smem:[#allocation5 + %s356]]
        %s358 = smul.addr %s357, 16
        %s359 = scalar_lea.hbm %s1, %s358
        %s360 = scalar_lea.vmem [#allocation2], 15
        // Predicated region
        $region89: #{tpu_custom_call.1} parent=23 // pred_check
          _
        $region90: #{tpu_custom_call.1} parent=23 // pred_check_branch
          %362 = sbr.rel target = $region92
        $region91: #{tpu_custom_call.1} parent=23 // pred_region
          %363 = sst [smem:[#allocation12]] [#allocation43]
          %364 = sst [smem:[#allocation13]] [#allocation42]
        $region92: #{tpu_custom_call.1} parent=23 // pred_fallthru
          _
        %366 = shalt.err (0)
        %s368 = sshll.u32 %s360, 4
        %s369 = int_to_ptr.vmem [resolvable:$true] %s368
        %371 = dma.hbm_to_vmem [thread:$0]  %s359, 16, %s369, [#allocation3]
        %373 = dma.done [#allocation3], 16
        %375 = dma.done [#allocation3], 16
        %377 = dma.done [#allocation3], 16
        %379 = dma.done [#allocation3], 16
        %381 = dma.done [#allocation3], 16
        %383 = dma.done [#allocation3], 16
        %385 = dma.done [#allocation3], 16
        %387 = dma.done [#allocation3], 16
        %389 = dma.done [#allocation3], 16
        %391 = dma.done [#allocation3], 16
        %393 = dma.done [#allocation3], 16
        %395 = dma.done [#allocation3], 16
        %397 = dma.done [#allocation3], 16
        %399 = dma.done [#allocation3], 16
        %401 = dma.done [#allocation3], 16
        %403 = dma.done [#allocation3], 16
        %v404 = vld [vmem:[#allocation2] sm:$0xff]
        %v405 = vld [vmem:[#allocation2 + $0x8] sm:$0xff]
        %v406 = vmul.f32 %v404, 11.313708
        %v407 = vmul.f32 %v405, 11.313708
        %v408 = vld [vmem:[#allocation6] sm:$0xff]
        %v409 = vld [vmem:[#allocation6 + $0x8] sm:$0xff]
        %v410 = vadd.f32 %v406, %v408
        %v411 = vadd.f32 %v407, %v409
        %412 = vst [vmem:[%s115] sm:$0xff] %v410
        %413 = vst [vmem:[%s115 + $0x8] sm:$0xff] %v411
        %s414 = sand.u32 %s51, 1
        %s415 = scalar_lea.sflag [#allocation8], %s414
        %s416 = sand.u32 %s51, 1
        %s417 = smul.addr %s416, 16
        %s418 = scalar_lea.vmem [#allocation9], %s417
        // Predicated region
        $region93: #{tpu_custom_call.1} parent=23 // pred_check
          %p419 = pneg %p61
        $region94: #{tpu_custom_call.1} parent=23 // pred_check_branch
          %421 = sbr.rel (%p419) target = $region96
        $region95: #{tpu_custom_call.1} parent=23 // pred_region
          %s422 = smul.u32 2, %s22
          %s424 = ssub.s32 256, 256
          %425 = vsyncadd %s415, %s424
          %s426 = smul.addr %s422, 128
          %s427 = scalar_lea.hbm %s3, %s426
          %s428 = sshll.u32 %s418, 4
          %s429 = int_to_ptr.vmem [resolvable:$true] %s428
          %434 = dma.vmem_to_hbm [thread:$0]  %s429, 256, %s427, %s415, 128, 128, 8
        $region96: #{tpu_custom_call.1} parent=23 // pred_fallthru
          _
      $region24: #{tpu_custom_call.1} parent=5 // pred_fallthru
        _
      %p435 = scmp.le.s32.totalorder 2, %s17
      // Predicated region
      $region97: #{tpu_custom_call.1} parent=5 // pred_check
        %p436 = pneg %p435
      $region98: #{tpu_custom_call.1} parent=5 // pred_check_branch
        %438 = sbr.rel (%p436) target = $region100
      $region99: #{tpu_custom_call.1} parent=5 // pred_region
        %s439 = ssub.s32 %s17, 2
        // Predicated region
        $region101: #{tpu_custom_call.1} parent=99 // pred_check
          %p440 = pneg %p67
        $region102: #{tpu_custom_call.1} parent=99 // pred_check_branch
          %442 = sbr.rel (%p440) target = $region104
        $region103: #{tpu_custom_call.1} parent=99 // pred_region
          %s443 = sand.u32 %s52, 1
          %s444 = scalar_lea.sflag [#allocation8], %s443
          %s445 = sand.u32 %s52, 1
          %s446 = smul.addr %s445, 16
          %s447 = scalar_lea.vmem [#allocation9], %s446
          %448 = dma.done %s444, 256
        $region104: #{tpu_custom_call.1} parent=99 // pred_fallthru
          _
      $region100: #{tpu_custom_call.1} parent=5 // pred_fallthru
        _
    $region6: #{tpu_custom_call.1} parent=1 // loop_footer
      %s21 = sadd.s32 1, %s17
    $region7: #{tpu_custom_call.1} parent=1 // loop_footer_branch
      %16 = sbr.rel target = $region3
    $region8: #{tpu_custom_call.1} parent=1 // loop_exit
      _
    %449 = vsyncpa [#allocation7], 1
    %s450 = scalar_lea.sflag [#allocation7], 1
    %451 = vsyncpa %s450, 1
    %452 = vsyncpa [#allocation8], 1
    %s453 = scalar_lea.sflag [#allocation8], 1
    %454 = vsyncpa %s453, 1
  %455 = vsyncmov [#allocation3]
  %s456 = vpop.sfrf %455
  %p457 = scmp.eq.s32.totalorder %s456, 0
  %p458 = pneg %p457
  %460 = shalt.err (%p458)

</llo_original>
